<compile_context>
chip_gen: v7x
topology: tpu7x:2x2x1
jax: 0.10.0
libtpu: 0.0.40
codegen_flags: <defaults>
</compile_context>

<pallas_src>
import functools

import jax
import jax.numpy as jnp
from jax.experimental import pallas as pl
from jax.experimental.pallas import tpu as pltpu

_MIB = 1024 * 1024


@functools.lru_cache(maxsize=1)
def _vmem_capacity_bytes() -> int:
    """Per-TensorCore VMEM capacity; conservative (v7x-sized) fallback."""
    try:
        info = pltpu.get_tpu_info()
        cap = int(getattr(info, "vmem_capacity_bytes", 0) or 0)
        if cap > 0:
            return cap
    except Exception:
        pass
    return 64 * _MIB  # v7x per-TC size; safe lower bound for v5e/v6e too


def _round_up(x: int, m: int) -> int:
    return -(-x // m) * m


def _round_down(x: int, m: int) -> int:
    return (x // m) * m


def _pick_layer_chunk(num_weighted: int) -> int:
    """Layers accumulated in vregs per reduction step."""
    for cand in (8, 7, 6, 5, 4, 3, 2):          # largest divisor <= 8: no padding
        if num_weighted % cand == 0:
            return cand
    # No small divisor (e.g. prime counts): pad weights with zeros and clamp
    # the layer index in the index_map (reads a valid layer, contributes 0).
    return min(num_weighted, 4)


def _pick_token_tile(n_tokens: int, lc: int, h: int, in_item: int, out_item: int,
                     use_acc: bool, budget_bytes: int, block_target_bytes: int,
                     row_align: int) -> int:
    if n_tokens <= row_align:
        return n_tokens
    per_row = 2 * lc * h * in_item + 2 * h * out_item + (4 * h if use_acc else 0)
    rows = min(block_target_bytes // max(1, lc * h * in_item),
               budget_bytes // max(1, per_row))
    # Guarantee >= 2 token tiles: keeps the "parallel" axis non-trivial so both
    # v7x TensorCores (and their DMA streams) are used.
    rows = min(rows, _round_up((n_tokens + 1) // 2, row_align))
    if rows >= n_tokens:
        return n_tokens
    return max(row_align, _round_down(rows, row_align))


def _make_wlp_kernel(lc: int, n_layer_blocks: int, use_acc: bool):
    def kernel(w_ref, *args):
        # w_ref          : SMEM (n_layer_blocks*lc,) f32, normalized weights
        # args[:lc]      : VMEM (1, tm, H)  -- lc layers of the current token tile
        # args[lc]       : VMEM (tm, H)     -- resident output tile
        # args[lc+1]     : VMEM (tm, H) f32 -- accumulator scratch (only if use_acc)
        x_refs = args[:lc]
        o_ref = args[lc]
        acc_ref = args[lc + 1] if use_acc else o_ref

        lb = pl.program_id(1)  # layer-block index (innermost reduction axis)

        # Weighted partial sum of this step's lc layers, held in vregs (f32).
        part = w_ref[lb * lc] * x_refs[0][0].astype(jnp.float32)
        for j in range(1, lc):  # static unroll; lc is a Python constant
            part = part + w_ref[lb * lc + j] * x_refs[j][0].astype(jnp.float32)

        if n_layer_blocks == 1:
            o_ref[...] = part.astype(o_ref.dtype)
        else:
            @pl.when(lb == 0)
            def _():
                acc_ref[...] = part

            @pl.when(jnp.logical_and(lb > 0, lb < n_layer_blocks - 1))
            def _():
                acc_ref[...] = acc_ref[...] + part

            @pl.when(lb == n_layer_blocks - 1)
            def _():
                # Fused final accumulate + cast + single store of the finished
                # tile; weights were pre-normalized, so no divide pass.
                o_ref[...] = (acc_ref[...] + part).astype(o_ref.dtype)

    return kernel


@functools.partial(jax.jit, static_argnames=("layer_start",))
def weighted_layer_pooling(all_hidden_states, layer_weights, layer_start: int = 4):
    """JAX/Pallas equivalent of WeightedLayerPooling.forward.

    all_hidden_states : [total_layers, B, S, H]
    layer_weights     : [total_layers - layer_start]
    returns           : [B, S, H]
    """
    T, B, S, H = all_hidden_states.shape
    L = T - layer_start
    assert layer_weights.shape == (L,)

    in_dtype = all_hidden_states.dtype
    out_dtype = jnp.promote_types(layer_weights.dtype, in_dtype)  # torch promotion
    in_item = in_dtype.itemsize
    out_item = out_dtype.itemsize

    # [T, B, S, H] -> [T, N, H]: layout-preserving reshape; hidden dim stays lane-dense.
    N = B * S
    x = all_hidden_states.reshape(T, N, H)

    lc = _pick_layer_chunk(L)                   # 21 weighted layers -> lc = 7
    n_layer_blocks = -(-L // lc)
    l_padded = n_layer_blocks * lc
    needs_clamp = l_padded != L

    # f32 outputs accumulate directly into the resident output block (no scratch).
    use_acc = (out_dtype != jnp.float32) and (n_layer_blocks > 1)

    # Sublane-packing alignment: 8 rows (f32), 16 (bf16), 32 (int8/fp8).
    row_align = 8 * max(1, 4 // in_item, 4 // out_item)

    # Chip-aware VMEM budget (v7x: 64 MiB -> ~48 MiB / ~8 MiB blocks;
    # v5e/v6e: 128 MiB -> ~96 MiB / ~16 MiB blocks).
    cap = _vmem_capacity_bytes()
    budget = min(cap * 3 // 4, 96 * _MIB)
    block_target = min(16 * _MIB, budget // 6)

    tm = _pick_token_tile(N, lc, H, in_item, out_item, use_acc,
                          budget, block_target, row_align)
    n_token_tiles = -(-N // tm)                 # cdiv: ragged last tile allowed

    # Normalize weights once (length-L scalar work) -> no in-kernel divide pass.
    w = layer_weights.astype(jnp.float32)
    w = w / jnp.sum(w)
    if needs_clamp:
        w = jnp.concatenate([w, jnp.zeros((l_padded - L,), jnp.float32)])

    def make_in_spec(j):
        if needs_clamp:
            def idx(i, l, w_s):
                return (layer_start + jnp.minimum(l * lc + j, L - 1), i, 0)
        else:
            def idx(i, l, w_s):
                return (layer_start + l * lc + j, i, 0)
        return pl.BlockSpec((1, tm, H), idx)

    in_specs = [make_in_spec(j) for j in range(lc)]
    out_spec = pl.BlockSpec((tm, H), lambda i, l, w_s: (i, 0))
    scratch = [pltpu.VMEM((tm, H), jnp.float32)] if use_acc else []

    # Actual resident VMEM (double-buffered inputs + output + acc) + headroom.
    resident = (2 * lc * tm * H * in_item + 2 * tm * H * out_item
                + (tm * H * 4 if use_acc else 0))
    vmem_limit = int(min(max(resident + max(resident // 4, 8 * _MIB), 32 * _MIB),
                         cap - 4 * _MIB))

    cost = pl.CostEstimate(
        flops=2 * L * N * H,
        transcendentals=0,
        bytes_accessed=L * N * H * in_item + N * H * out_item,
    )

    kernel = _make_wlp_kernel(lc, n_layer_blocks, use_acc)

    out_flat = pl.pallas_call(
        kernel,
        out_shape=jax.ShapeDtypeStruct((N, H), out_dtype),
        grid_spec=pltpu.PrefetchScalarGridSpec(
            num_scalar_prefetch=1,
            grid=(n_token_tiles, n_layer_blocks),   # layer reduction innermost
            in_specs=in_specs,
            out_specs=out_spec,
            scratch_shapes=scratch,
        ),
        compiler_params=pltpu.CompilerParams(
            dimension_semantics=("parallel", "arbitrary"),
            vmem_limit_bytes=vmem_limit,
        ),
        cost_estimate=cost,
    )(w, *([x] * lc))

    return out_flat.reshape(B, S, H)


if __name__ == "__main__":
    # Module config (matches WeightedLayerPooling.__init__ defaults)
    layer_start = 4
    total_layers = 25
    num_weighted = total_layers - layer_start  # 21

    # Small shapes consistent with (layers, batch, seq, hidden)
    B, S, H = 2, 8, 32

    key = jax.random.PRNGKey(0)
    k_x, k_w = jax.random.split(key)
    all_hidden_states = jax.random.normal(
        k_x, (total_layers, B, S, H), dtype=jnp.float32
    )
    # Deterministic, non-trivial weighting (module default init is ones).
    layer_weights = 1.0 + 0.1 * jax.random.uniform(
        k_w, (num_weighted,), dtype=jnp.float32
    )

    out = weighted_layer_pooling(all_hidden_states, layer_weights,
                                 layer_start=layer_start)
    out = jax.block_until_ready(out)

    # Pure-JAX reference (mirrors the PyTorch forward exactly)
    x_ref = all_hidden_states[layer_start:]
    ref = (layer_weights[:, None, None, None] * x_ref).sum(axis=0) / layer_weights.sum()

    assert out.shape == (B, S, H)
    assert jnp.allclose(out, ref, atol=1e-5, rtol=1e-5)
    print("KERNEL_OK")
</pallas_src>

<mosaic_0001>
module attributes {stable_mosaic.version = 11 : i64} {
  func.func @kernel(%arg0: i32, %arg1: i32, %arg2: memref<21xf32, #tpu.memory_space<smem>>, %arg3: memref<1x8x32xf32, #tpu.memory_space<vmem>>, %arg4: memref<1x8x32xf32, #tpu.memory_space<vmem>>, %arg5: memref<1x8x32xf32, #tpu.memory_space<vmem>>, %arg6: memref<1x8x32xf32, #tpu.memory_space<vmem>>, %arg7: memref<1x8x32xf32, #tpu.memory_space<vmem>>, %arg8: memref<1x8x32xf32, #tpu.memory_space<vmem>>, %arg9: memref<1x8x32xf32, #tpu.memory_space<vmem>>, %arg10: memref<8x32xf32, #tpu.memory_space<vmem>>) attributes {dimension_semantics = [#tpu.dimension_semantics<parallel>, #tpu.dimension_semantics<arbitrary>], iteration_bounds = array<i64: 2, 3>, scalar_prefetch = 1 : i64, scratch_operands = 0 : i64, tpu.core_type = #tpu.core_type<tc>, window_params = [{transform_indices = @transform_0, window_bounds = array<i64: 1, 8, 32>}, {transform_indices = @transform_1, window_bounds = array<i64: 1, 8, 32>}, {transform_indices = @transform_2, window_bounds = array<i64: 1, 8, 32>}, {transform_indices = @transform_3, window_bounds = array<i64: 1, 8, 32>}, {transform_indices = @transform_4, window_bounds = array<i64: 1, 8, 32>}, {transform_indices = @transform_5, window_bounds = array<i64: 1, 8, 32>}, {transform_indices = @transform_6, window_bounds = array<i64: 1, 8, 32>}, {transform_indices = @transform_7, window_bounds = array<i64: 8, 32>}]} {
    %c7_i32 = arith.constant 7 : i32
    %0 = arith.muli %arg1, %c7_i32 : i32
    %1 = arith.index_cast %0 : i32 to index
    %2 = memref.load %arg2[%1] : memref<21xf32, #tpu.memory_space<smem>>
    %c0 = arith.constant 0 : index
    %c0_0 = arith.constant 0 : index
    %c0_1 = arith.constant 0 : index
    %3 = vector.load %arg3[%c0, %c0_0, %c0_1] : memref<1x8x32xf32, #tpu.memory_space<vmem>>, vector<1x8x32xf32>
    %4 = vector.shape_cast %3 : vector<1x8x32xf32> to vector<8x32xf32>
    %5 = vector.broadcast %2 : f32 to vector<8x32xf32>
    %6 = arith.mulf %5, %4 : vector<8x32xf32>
    %c7_i32_2 = arith.constant 7 : i32
    %7 = arith.muli %arg1, %c7_i32_2 : i32
    %c1_i32 = arith.constant 1 : i32
    %8 = arith.addi %7, %c1_i32 : i32
    %9 = arith.index_cast %8 : i32 to index
    %10 = memref.load %arg2[%9] : memref<21xf32, #tpu.memory_space<smem>>
    %c0_3 = arith.constant 0 : index
    %c0_4 = arith.constant 0 : index
    %c0_5 = arith.constant 0 : index
    %11 = vector.load %arg4[%c0_3, %c0_4, %c0_5] : memref<1x8x32xf32, #tpu.memory_space<vmem>>, vector<1x8x32xf32>
    %12 = vector.shape_cast %11 : vector<1x8x32xf32> to vector<8x32xf32>
    %13 = vector.broadcast %10 : f32 to vector<8x32xf32>
    %14 = arith.mulf %13, %12 : vector<8x32xf32>
    %15 = arith.addf %6, %14 : vector<8x32xf32>
    %c7_i32_6 = arith.constant 7 : i32
    %16 = arith.muli %arg1, %c7_i32_6 : i32
    %c2_i32 = arith.constant 2 : i32
    %17 = arith.addi %16, %c2_i32 : i32
    %18 = arith.index_cast %17 : i32 to index
    %19 = memref.load %arg2[%18] : memref<21xf32, #tpu.memory_space<smem>>
    %c0_7 = arith.constant 0 : index
    %c0_8 = arith.constant 0 : index
    %c0_9 = arith.constant 0 : index
    %20 = vector.load %arg5[%c0_7, %c0_8, %c0_9] : memref<1x8x32xf32, #tpu.memory_space<vmem>>, vector<1x8x32xf32>
    %21 = vector.shape_cast %20 : vector<1x8x32xf32> to vector<8x32xf32>
    %22 = vector.broadcast %19 : f32 to vector<8x32xf32>
    %23 = arith.mulf %22, %21 : vector<8x32xf32>
    %24 = arith.addf %15, %23 : vector<8x32xf32>
    %c7_i32_10 = arith.constant 7 : i32
    %25 = arith.muli %arg1, %c7_i32_10 : i32
    %c3_i32 = arith.constant 3 : i32
    %26 = arith.addi %25, %c3_i32 : i32
    %27 = arith.index_cast %26 : i32 to index
    %28 = memref.load %arg2[%27] : memref<21xf32, #tpu.memory_space<smem>>
    %c0_11 = arith.constant 0 : index
    %c0_12 = arith.constant 0 : index
    %c0_13 = arith.constant 0 : index
    %29 = vector.load %arg6[%c0_11, %c0_12, %c0_13] : memref<1x8x32xf32, #tpu.memory_space<vmem>>, vector<1x8x32xf32>
    %30 = vector.shape_cast %29 : vector<1x8x32xf32> to vector<8x32xf32>
    %31 = vector.broadcast %28 : f32 to vector<8x32xf32>
    %32 = arith.mulf %31, %30 : vector<8x32xf32>
    %33 = arith.addf %24, %32 : vector<8x32xf32>
    %c7_i32_14 = arith.constant 7 : i32
    %34 = arith.muli %arg1, %c7_i32_14 : i32
    %c4_i32 = arith.constant 4 : i32
    %35 = arith.addi %34, %c4_i32 : i32
    %36 = arith.index_cast %35 : i32 to index
    %37 = memref.load %arg2[%36] : memref<21xf32, #tpu.memory_space<smem>>
    %c0_15 = arith.constant 0 : index
    %c0_16 = arith.constant 0 : index
    %c0_17 = arith.constant 0 : index
    %38 = vector.load %arg7[%c0_15, %c0_16, %c0_17] : memref<1x8x32xf32, #tpu.memory_space<vmem>>, vector<1x8x32xf32>
    %39 = vector.shape_cast %38 : vector<1x8x32xf32> to vector<8x32xf32>
    %40 = vector.broadcast %37 : f32 to vector<8x32xf32>
    %41 = arith.mulf %40, %39 : vector<8x32xf32>
    %42 = arith.addf %33, %41 : vector<8x32xf32>
    %c7_i32_18 = arith.constant 7 : i32
    %43 = arith.muli %arg1, %c7_i32_18 : i32
    %c5_i32 = arith.constant 5 : i32
    %44 = arith.addi %43, %c5_i32 : i32
    %45 = arith.index_cast %44 : i32 to index
    %46 = memref.load %arg2[%45] : memref<21xf32, #tpu.memory_space<smem>>
    %c0_19 = arith.constant 0 : index
    %c0_20 = arith.constant 0 : index
    %c0_21 = arith.constant 0 : index
    %47 = vector.load %arg8[%c0_19, %c0_20, %c0_21] : memref<1x8x32xf32, #tpu.memory_space<vmem>>, vector<1x8x32xf32>
    %48 = vector.shape_cast %47 : vector<1x8x32xf32> to vector<8x32xf32>
    %49 = vector.broadcast %46 : f32 to vector<8x32xf32>
    %50 = arith.mulf %49, %48 : vector<8x32xf32>
    %51 = arith.addf %42, %50 : vector<8x32xf32>
    %c7_i32_22 = arith.constant 7 : i32
    %52 = arith.muli %arg1, %c7_i32_22 : i32
    %c6_i32 = arith.constant 6 : i32
    %53 = arith.addi %52, %c6_i32 : i32
    %54 = arith.index_cast %53 : i32 to index
    %55 = memref.load %arg2[%54] : memref<21xf32, #tpu.memory_space<smem>>
    %c0_23 = arith.constant 0 : index
    %c0_24 = arith.constant 0 : index
    %c0_25 = arith.constant 0 : index
    %56 = vector.load %arg9[%c0_23, %c0_24, %c0_25] : memref<1x8x32xf32, #tpu.memory_space<vmem>>, vector<1x8x32xf32>
    %57 = vector.shape_cast %56 : vector<1x8x32xf32> to vector<8x32xf32>
    %58 = vector.broadcast %55 : f32 to vector<8x32xf32>
    %59 = arith.mulf %58, %57 : vector<8x32xf32>
    %60 = arith.addf %51, %59 : vector<8x32xf32>
    %c0_i32 = arith.constant 0 : i32
    %61 = arith.cmpi eq, %arg1, %c0_i32 : i32
    %62 = arith.extui %61 : i1 to i32
    %c0_i32_26 = arith.constant 0 : i32
    %63 = arith.cmpi ne, %62, %c0_i32_26 : i32
    scf.if %63 {
      %c0_32 = arith.constant 0 : index
      %c0_33 = arith.constant 0 : index
      %72 = vector.load %arg10[%c0_32, %c0_33] : memref<8x32xf32, #tpu.memory_space<vmem>>, vector<8x32xf32>
      tpu.vector_store %arg10[%c0_32, %c0_33], %60 {strides = array<i32>} : memref<8x32xf32, #tpu.memory_space<vmem>>, vector<8x32xf32>,
    } else {
    }
    %c0_i32_27 = arith.constant 0 : i32
    %64 = arith.cmpi sgt, %arg1, %c0_i32_27 : i32
    %c2_i32_28 = arith.constant 2 : i32
    %65 = arith.cmpi slt, %arg1, %c2_i32_28 : i32
    %66 = arith.andi %64, %65 : i1
    %67 = arith.extui %66 : i1 to i32
    %c0_i32_29 = arith.constant 0 : i32
    %68 = arith.cmpi ne, %67, %c0_i32_29 : i32
    scf.if %68 {
      %c0_32 = arith.constant 0 : index
      %c0_33 = arith.constant 0 : index
      %72 = vector.load %arg10[%c0_32, %c0_33] : memref<8x32xf32, #tpu.memory_space<vmem>>, vector<8x32xf32>
      %73 = arith.addf %72, %60 : vector<8x32xf32>
      %c0_34 = arith.constant 0 : index
      %c0_35 = arith.constant 0 : index
      %74 = vector.load %arg10[%c0_34, %c0_35] : memref<8x32xf32, #tpu.memory_space<vmem>>, vector<8x32xf32>
      tpu.vector_store %arg10[%c0_34, %c0_35], %73 {strides = array<i32>} : memref<8x32xf32, #tpu.memory_space<vmem>>, vector<8x32xf32>,
    } else {
    }
    %c2_i32_30 = arith.constant 2 : i32
    %69 = arith.cmpi eq, %arg1, %c2_i32_30 : i32
    %70 = arith.extui %69 : i1 to i32
    %c0_i32_31 = arith.constant 0 : i32
    %71 = arith.cmpi ne, %70, %c0_i32_31 : i32
    scf.if %71 {
      %c0_32 = arith.constant 0 : index
      %c0_33 = arith.constant 0 : index
      %72 = vector.load %arg10[%c0_32, %c0_33] : memref<8x32xf32, #tpu.memory_space<vmem>>, vector<8x32xf32>
      %73 = arith.addf %72, %60 : vector<8x32xf32>
      %c0_34 = arith.constant 0 : index
      %c0_35 = arith.constant 0 : index
      %74 = vector.load %arg10[%c0_34, %c0_35] : memref<8x32xf32, #tpu.memory_space<vmem>>, vector<8x32xf32>
      tpu.vector_store %arg10[%c0_34, %c0_35], %73 {strides = array<i32>} : memref<8x32xf32, #tpu.memory_space<vmem>>, vector<8x32xf32>,
    } else {
    }
    return
  }
  func.func @transform_0(%arg0: i32, %arg1: i32, %arg2: memref<21xf32, #tpu.memory_space<smem>>) -> (i32, i32, i32) {
    %c7_i32 = arith.constant 7 : i32
    %0 = arith.muli %arg1, %c7_i32 : i32
    %c4_i32 = arith.constant 4 : i32
    %1 = arith.addi %c4_i32, %0 : i32
    %c0_i32 = arith.constant 0 : i32
    %2 = arith.addi %1, %c0_i32 : i32
    %c0_i32_0 = arith.constant 0 : i32
    %c0_i32_1 = arith.constant 0 : i32
    return %2, %arg0, %c0_i32_0 : i32, i32, i32
  }
  func.func @transform_1(%arg0: i32, %arg1: i32, %arg2: memref<21xf32, #tpu.memory_space<smem>>) -> (i32, i32, i32) {
    %c7_i32 = arith.constant 7 : i32
    %0 = arith.muli %arg1, %c7_i32 : i32
    %c4_i32 = arith.constant 4 : i32
    %1 = arith.addi %c4_i32, %0 : i32
    %c1_i32 = arith.constant 1 : i32
    %2 = arith.addi %1, %c1_i32 : i32
    %c0_i32 = arith.constant 0 : i32
    %c0_i32_0 = arith.constant 0 : i32
    return %2, %arg0, %c0_i32 : i32, i32, i32
  }
  func.func @transform_2(%arg0: i32, %arg1: i32, %arg2: memref<21xf32, #tpu.memory_space<smem>>) -> (i32, i32, i32) {
    %c7_i32 = arith.constant 7 : i32
    %0 = arith.muli %arg1, %c7_i32 : i32
    %c4_i32 = arith.constant 4 : i32
    %1 = arith.addi %c4_i32, %0 : i32
    %c2_i32 = arith.constant 2 : i32
    %2 = arith.addi %1, %c2_i32 : i32
    %c0_i32 = arith.constant 0 : i32
    %c0_i32_0 = arith.constant 0 : i32
    return %2, %arg0, %c0_i32 : i32, i32, i32
  }
  func.func @transform_3(%arg0: i32, %arg1: i32, %arg2: memref<21xf32, #tpu.memory_space<smem>>) -> (i32, i32, i32) {
    %c7_i32 = arith.constant 7 : i32
    %0 = arith.muli %arg1, %c7_i32 : i32
    %c4_i32 = arith.constant 4 : i32
    %1 = arith.addi %c4_i32, %0 : i32
    %c3_i32 = arith.constant 3 : i32
    %2 = arith.addi %1, %c3_i32 : i32
    %c0_i32 = arith.constant 0 : i32
    %c0_i32_0 = arith.constant 0 : i32
    return %2, %arg0, %c0_i32 : i32, i32, i32
  }
  func.func @transform_4(%arg0: i32, %arg1: i32, %arg2: memref<21xf32, #tpu.memory_space<smem>>) -> (i32, i32, i32) {
    %c7_i32 = arith.constant 7 : i32
    %0 = arith.muli %arg1, %c7_i32 : i32
    %c4_i32 = arith.constant 4 : i32
    %1 = arith.addi %c4_i32, %0 : i32
    %c4_i32_0 = arith.constant 4 : i32
    %2 = arith.addi %1, %c4_i32_0 : i32
    %c0_i32 = arith.constant 0 : i32
    %c0_i32_1 = arith.constant 0 : i32
    return %2, %arg0, %c0_i32 : i32, i32, i32
  }
  func.func @transform_5(%arg0: i32, %arg1: i32, %arg2: memref<21xf32, #tpu.memory_space<smem>>) -> (i32, i32, i32) {
    %c7_i32 = arith.constant 7 : i32
    %0 = arith.muli %arg1, %c7_i32 : i32
    %c4_i32 = arith.constant 4 : i32
    %1 = arith.addi %c4_i32, %0 : i32
    %c5_i32 = arith.constant 5 : i32
    %2 = arith.addi %1, %c5_i32 : i32
    %c0_i32 = arith.constant 0 : i32
    %c0_i32_0 = arith.constant 0 : i32
    return %2, %arg0, %c0_i32 : i32, i32, i32
  }
  func.func @transform_6(%arg0: i32, %arg1: i32, %arg2: memref<21xf32, #tpu.memory_space<smem>>) -> (i32, i32, i32) {
    %c7_i32 = arith.constant 7 : i32
    %0 = arith.muli %arg1, %c7_i32 : i32
    %c4_i32 = arith.constant 4 : i32
    %1 = arith.addi %c4_i32, %0 : i32
    %c6_i32 = arith.constant 6 : i32
    %2 = arith.addi %1, %c6_i32 : i32
    %c0_i32 = arith.constant 0 : i32
    %c0_i32_0 = arith.constant 0 : i32
    return %2, %arg0, %c0_i32 : i32, i32, i32
  }
  func.func @transform_7(%arg0: i32, %arg1: i32, %arg2: memref<21xf32, #tpu.memory_space<smem>>) -> (i32, i32) {
    %c0_i32 = arith.constant 0 : i32
    %c0_i32_0 = arith.constant 0 : i32
    return %arg0, %c0_i32 : i32, i32
  }
}

</mosaic_0001>

<llo_original>
// kernel: weighted_layer_pooling.1
$region0: #{weighted_layer_pooling.1}
  #allocation0 [shape = 'u32[]', space=smem, size = 0x4, offset = 0x4, fixed_abs, tag = 'smem constant byte address 0x4 - core index']
  #allocation1 [shape = 'u32[144,128]{1,0:T(1,128)}', space=vmem, size = 0x12000, scoped, tag = 'internal scratch']
  #allocation2 [shape = 's32[1]{0}', space=sflag, size = 0x4, scoped, tag = 'scoped memory for weighted_layer_pooling.1']
  #allocation3 [shape = 'u8[512]{0}', space=smem, size = 0x200, scoped, tag = 'prefetched SMEM operand 0']
  %s0 = inlined_call_operand.vmem [shape: f32[21], index: 0, kind: input, shape index: {}]
  %s1 = inlined_call_operand.hbm [shape: f32[25,16,32], index: 1, kind: input, shape index: {}, may-alias: {1,2,3,4,5,6,7}]
  %s2 = inlined_call_operand.hbm [shape: f32[25,16,32], index: 2, kind: input, shape index: {}, may-alias: {1,2,3,4,5,6,7}]
  %s3 = inlined_call_operand.hbm [shape: f32[25,16,32], index: 3, kind: input, shape index: {}, may-alias: {1,2,3,4,5,6,7}]
  %s4 = inlined_call_operand.hbm [shape: f32[25,16,32], index: 4, kind: input, shape index: {}, may-alias: {1,2,3,4,5,6,7}]
  %s5 = inlined_call_operand.hbm [shape: f32[25,16,32], index: 5, kind: input, shape index: {}, may-alias: {1,2,3,4,5,6,7}]
  %s6 = inlined_call_operand.hbm [shape: f32[25,16,32], index: 6, kind: input, shape index: {}, may-alias: {1,2,3,4,5,6,7}]
  %s7 = inlined_call_operand.hbm [shape: f32[25,16,32], index: 7, kind: input, shape index: {}, may-alias: {1,2,3,4,5,6,7}]
  %s8 = inlined_call_operand.hbm [shape: f32[16,32], index: 8, kind: output, shape index: {}]
  %s9 = sld [smem:[#allocation0]]
  $region101: #{weighted_layer_pooling.1} parent=0
    _
  %s11 = ssub.s32 1, %s9
  %s12 = scalar_select 0, %s11, %s9
  %s13 = sshll.u32 %s0, 4
  %s14 = int_to_ptr.vmem [resolvable:$true] %s13
  %16 = dma.vmem_to_smem %s14, 16, [#allocation3], [#allocation2]
  %17 = dma.done [#allocation2], 16
  %18 = sfence
  $region1: #{weighted_layer_pooling.1} parent=0
    #allocation4 [shape = 'u8[8192]{0}', space=vmem, size = 0x2000, scoped, tag = 'input window, operand 1']
    #allocation5 [shape = 's32[2]{0}', space=sflag, size = 0x8, scoped, tag = 'scoped memory for weighted_layer_pooling.1']
    #allocation6 [shape = 's32[2]{0}', space=sflag, size = 0x8, scoped, tag = 'scoped memory for weighted_layer_pooling.1']
    #allocation7 [shape = 'u8[8192]{0}', space=vmem, size = 0x2000, scoped, tag = 'input window, operand 2']
    #allocation8 [shape = 's32[2]{0}', space=sflag, size = 0x8, scoped, tag = 'scoped memory for weighted_layer_pooling.1']
    #allocation9 [shape = 'u8[8192]{0}', space=vmem, size = 0x2000, scoped, tag = 'input window, operand 3']
    #allocation10 [shape = 'u8[8192]{0}', space=vmem, size = 0x2000, scoped, tag = 'input window, operand 4']
    #allocation11 [shape = 's32[2]{0}', space=sflag, size = 0x8, scoped, tag = 'scoped memory for weighted_layer_pooling.1']
    #allocation12 [shape = 'u8[8192]{0}', space=vmem, size = 0x2000, scoped, tag = 'input window, operand 5']
    #allocation13 [shape = 'u8[8192]{0}', space=vmem, size = 0x2000, scoped, tag = 'input window, operand 6']
    #allocation14 [shape = 's32[2]{0}', space=sflag, size = 0x8, scoped, tag = 'scoped memory for weighted_layer_pooling.1']
    #allocation15 [shape = 'u8[8192]{0}', space=vmem, size = 0x2000, scoped, tag = 'input window, operand 7']
    #allocation16 [shape = 'u8[8192]{0}', space=vmem, size = 0x2000, scoped, tag = 'output window, operand 0']
    %19 = vsyncpa [#allocation5], 0
    %s20 = scalar_lea.sflag [#allocation5], 1
    %21 = vsyncpa %s20, 0
    %22 = vsyncpa [#allocation8], 0
    %s23 = scalar_lea.sflag [#allocation8], 1
    %24 = vsyncpa %s23, 0
    %25 = vsyncpa [#allocation11], 0
    %s26 = scalar_lea.sflag [#allocation11], 1
    %27 = vsyncpa %s26, 0
    %28 = vsyncpa [#allocation14], 0
    %s29 = scalar_lea.sflag [#allocation14], 1
    %30 = vsyncpa %s29, 0
    %31 = vsyncpa [#allocation6], 0
    %s32 = scalar_lea.sflag [#allocation6], 1
    %33 = vsyncpa %s32, 0
    loop: start=0, step=1, limit=8
    $region2: #{weighted_layer_pooling.1} parent=1 // loop_pre_header
      _
    $region3: #{weighted_layer_pooling.1} parent=1 // loop_header
      %s35 = sphi 0, %s39
      %p36 = scmp.ge.s32.totalorder %s35, 8
      %s42 = sphi 0, %s54
      %s43 = sphi 0, %s50
      %s44 = sphi 0, %s42
      %s45 = sphi 0, %s43
      %s46 = sphi 0, %s44
      %s47 = sphi 0, %s45
      %s63 = sphi 0, %s65
      %s66 = sphi 0, %s63
      %s67 = sphi 0, %s66
      %s83 = sphi 0, %s67
      %s95 = sphi 0, %s97
      %s98 = sphi 0, %s95
      %s99 = sphi 0, %s98
      %s115 = sphi 0, %s99
      %s127 = sphi 0, %s129
      %s130 = sphi 0, %s127
      %s131 = sphi 0, %s130
      %s147 = sphi 0, %s131
      %s159 = sphi 0, %s161
      %s162 = sphi 0, %s159
      %s163 = sphi 0, %s162
      %s179 = sphi 0, %s163
      %s191 = sphi 0, %s193
      %s194 = sphi 0, %s191
      %s195 = sphi 0, %s194
      %s211 = sphi 0, %s195
      %s223 = sphi 0, %s225
      %s226 = sphi 0, %s223
      %s227 = sphi 0, %s226
      %s243 = sphi 0, %s227
      %s255 = sphi 0, %s257
      %s258 = sphi 0, %s255
      %s259 = sphi 0, %s258
      %s275 = sphi 0, %s259
      %s281 = sphi 0, %s283
      %s284 = sphi 0, %s281
      %s285 = sphi 0, %s284
      %s301 = sphi 0, %s285
    $region4: #{weighted_layer_pooling.1} parent=1 // loop_header_branch
      %38 = sbr.rel (%p36) target = $region8
    $region5: #{weighted_layer_pooling.1} parent=1 // loop_body
      %s40 = ssub.s32 %s35, 1
      %s41 = ssub.s32 %s35, 2
      %s48 = sadd.s32 1, %s43
      %p49 = scmp.ge.s32.totalorder %s48, 3
      %s50 = scalar_select %p49, 0, %s48
      %s51 = sadd.s32 1, %s42
      %s52 = scalar_select %p49, %s51, %s42
      %p53 = scmp.ge.s32.totalorder %s52, 2
      %s54 = scalar_select %p53, 0, %s52
      %s55 = smul.u32 %s43, 7
      %s56 = sadd.s32 %s55, 4
      %s57 = smul.u32 %s50, 7
      %s58 = sadd.s32 %s57, 4
      %s59 = ssub.s32 %s56, %s58
      %s60 = ssub.s32 %s42, %s54
      %s61 = sor.u32 %s59, %s60
      %p62 = scmp.eq.s32.totalorder %s61, 0
      %s64 = sadd.s32 %s63, 1
      %s65 = scalar_select %p62, %s63, %s64
      %p68 = pneg %p62
      %p69 = scmp.eq.s32.totalorder %s35, 5
      %p70 = por %p68, %p69
      %p71 = scmp.ne.s32.totalorder %s63, %s66
      %p72 = scmp.eq.s32.totalorder %s35, 0
      %p73 = por %p71, %p72
      %p74 = scmp.ne.s32.totalorder %s63, %s66
      %p75 = scmp.eq.s32.totalorder %s40, 5
      %p76 = por %p74, %p75
      %p77 = scmp.ne.s32.totalorder %s66, %s67
      %p78 = scmp.eq.s32.totalorder %s40, 0
      %p79 = por %p77, %p78
      %p80 = scmp.ne.s32.totalorder %s66, %s67
      %p81 = scmp.eq.s32.totalorder %s41, 5
      %p82 = por %p80, %p81
      %p84 = scmp.ne.s32.totalorder %s67, %s83
      %p85 = scmp.eq.s32.totalorder %s41, 0
      %p86 = por %p84, %p85
      %s87 = smul.u32 %s43, 7
      %s88 = sadd.s32 %s87, 5
      %s89 = smul.u32 %s50, 7
      %s90 = sadd.s32 %s89, 5
      %s91 = ssub.s32 %s88, %s90
      %s92 = ssub.s32 %s42, %s54
      %s93 = sor.u32 %s91, %s92
      %p94 = scmp.eq.s32.totalorder %s93, 0
      %s96 = sadd.s32 %s95, 1
      %s97 = scalar_select %p94, %s95, %s96
      %p100 = pneg %p94
      %p101 = scmp.eq.s32.totalorder %s35, 5
      %p102 = por %p100, %p101
      %p103 = scmp.ne.s32.totalorder %s95, %s98
      %p104 = scmp.eq.s32.totalorder %s35, 0
      %p105 = por %p103, %p104
      %p106 = scmp.ne.s32.totalorder %s95, %s98
      %p107 = scmp.eq.s32.totalorder %s40, 5
      %p108 = por %p106, %p107
      %p109 = scmp.ne.s32.totalorder %s98, %s99
      %p110 = scmp.eq.s32.totalorder %s40, 0
      %p111 = por %p109, %p110
      %p112 = scmp.ne.s32.totalorder %s98, %s99
      %p113 = scmp.eq.s32.totalorder %s41, 5
      %p114 = por %p112, %p113
      %p116 = scmp.ne.s32.totalorder %s99, %s115
      %p117 = scmp.eq.s32.totalorder %s41, 0
      %p118 = por %p116, %p117
      %s119 = smul.u32 %s43, 7
      %s120 = sadd.s32 %s119, 6
      %s121 = smul.u32 %s50, 7
      %s122 = sadd.s32 %s121, 6
      %s123 = ssub.s32 %s120, %s122
      %s124 = ssub.s32 %s42, %s54
      %s125 = sor.u32 %s123, %s124
      %p126 = scmp.eq.s32.totalorder %s125, 0
      %s128 = sadd.s32 %s127, 1
      %s129 = scalar_select %p126, %s127, %s128
      %p132 = pneg %p126
      %p133 = scmp.eq.s32.totalorder %s35, 5
      %p134 = por %p132, %p133
      %p135 = scmp.ne.s32.totalorder %s127, %s130
      %p136 = scmp.eq.s32.totalorder %s35, 0
      %p137 = por %p135, %p136
      %p138 = scmp.ne.s32.totalorder %s127, %s130
      %p139 = scmp.eq.s32.totalorder %s40, 5
      %p140 = por %p138, %p139
      %p141 = scmp.ne.s32.totalorder %s130, %s131
      %p142 = scmp.eq.s32.totalorder %s40, 0
      %p143 = por %p141, %p142
      %p144 = scmp.ne.s32.totalorder %s130, %s131
      %p145 = scmp.eq.s32.totalorder %s41, 5
      %p146 = por %p144, %p145
      %p148 = scmp.ne.s32.totalorder %s131, %s147
      %p149 = scmp.eq.s32.totalorder %s41, 0
      %p150 = por %p148, %p149
      %s151 = smul.u32 %s43, 7
      %s152 = sadd.s32 %s151, 7
      %s153 = smul.u32 %s50, 7
      %s154 = sadd.s32 %s153, 7
      %s155 = ssub.s32 %s152, %s154
      %s156 = ssub.s32 %s42, %s54
      %s157 = sor.u32 %s155, %s156
      %p158 = scmp.eq.s32.totalorder %s157, 0
      %s160 = sadd.s32 %s159, 1
      %s161 = scalar_select %p158, %s159, %s160
      %p164 = pneg %p158
      %p165 = scmp.eq.s32.totalorder %s35, 5
      %p166 = por %p164, %p165
      %p167 = scmp.ne.s32.totalorder %s159, %s162
      %p168 = scmp.eq.s32.totalorder %s35, 0
      %p169 = por %p167, %p168
      %p170 = scmp.ne.s32.totalorder %s159, %s162
      %p171 = scmp.eq.s32.totalorder %s40, 5
      %p172 = por %p170, %p171
      %p173 = scmp.ne.s32.totalorder %s162, %s163
      %p174 = scmp.eq.s32.totalorder %s40, 0
      %p175 = por %p173, %p174
      %p176 = scmp.ne.s32.totalorder %s162, %s163
      %p177 = scmp.eq.s32.totalorder %s41, 5
      %p178 = por %p176, %p177
      %p180 = scmp.ne.s32.totalorder %s163, %s179
      %p181 = scmp.eq.s32.totalorder %s41, 0
      %p182 = por %p180, %p181
      %s183 = smul.u32 %s43, 7
      %s184 = sadd.s32 %s183, 8
      %s185 = smul.u32 %s50, 7
      %s186 = sadd.s32 %s185, 8
      %s187 = ssub.s32 %s184, %s186
      %s188 = ssub.s32 %s42, %s54
      %s189 = sor.u32 %s187, %s188
      %p190 = scmp.eq.s32.totalorder %s189, 0
      %s192 = sadd.s32 %s191, 1
      %s193 = scalar_select %p190, %s191, %s192
      %p196 = pneg %p190
      %p197 = scmp.eq.s32.totalorder %s35, 5
      %p198 = por %p196, %p197
      %p199 = scmp.ne.s32.totalorder %s191, %s194
      %p200 = scmp.eq.s32.totalorder %s35, 0
      %p201 = por %p199, %p200
      %p202 = scmp.ne.s32.totalorder %s191, %s194
      %p203 = scmp.eq.s32.totalorder %s40, 5
      %p204 = por %p202, %p203
      %p205 = scmp.ne.s32.totalorder %s194, %s195
      %p206 = scmp.eq.s32.totalorder %s40, 0
      %p207 = por %p205, %p206
      %p208 = scmp.ne.s32.totalorder %s194, %s195
      %p209 = scmp.eq.s32.totalorder %s41, 5
      %p210 = por %p208, %p209
      %p212 = scmp.ne.s32.totalorder %s195, %s211
      %p213 = scmp.eq.s32.totalorder %s41, 0
      %p214 = por %p212, %p213
      %s215 = smul.u32 %s43, 7
      %s216 = sadd.s32 %s215, 9
      %s217 = smul.u32 %s50, 7
      %s218 = sadd.s32 %s217, 9
      %s219 = ssub.s32 %s216, %s218
      %s220 = ssub.s32 %s42, %s54
      %s221 = sor.u32 %s219, %s220
      %p222 = scmp.eq.s32.totalorder %s221, 0
      %s224 = sadd.s32 %s223, 1
      %s225 = scalar_select %p222, %s223, %s224
      %p228 = pneg %p222
      %p229 = scmp.eq.s32.totalorder %s35, 5
      %p230 = por %p228, %p229
      %p231 = scmp.ne.s32.totalorder %s223, %s226
      %p232 = scmp.eq.s32.totalorder %s35, 0
      %p233 = por %p231, %p232
      %p234 = scmp.ne.s32.totalorder %s223, %s226
      %p235 = scmp.eq.s32.totalorder %s40, 5
      %p236 = por %p234, %p235
      %p237 = scmp.ne.s32.totalorder %s226, %s227
      %p238 = scmp.eq.s32.totalorder %s40, 0
      %p239 = por %p237, %p238
      %p240 = scmp.ne.s32.totalorder %s226, %s227
      %p241 = scmp.eq.s32.totalorder %s41, 5
      %p242 = por %p240, %p241
      %p244 = scmp.ne.s32.totalorder %s227, %s243
      %p245 = scmp.eq.s32.totalorder %s41, 0
      %p246 = por %p244, %p245
      %s247 = smul.u32 %s43, 7
      %s248 = sadd.s32 %s247, 10
      %s249 = smul.u32 %s50, 7
      %s250 = sadd.s32 %s249, 10
      %s251 = ssub.s32 %s248, %s250
      %s252 = ssub.s32 %s42, %s54
      %s253 = sor.u32 %s251, %s252
      %p254 = scmp.eq.s32.totalorder %s253, 0
      %s256 = sadd.s32 %s255, 1
      %s257 = scalar_select %p254, %s255, %s256
      %p260 = pneg %p254
      %p261 = scmp.eq.s32.totalorder %s35, 5
      %p262 = por %p260, %p261
      %p263 = scmp.ne.s32.totalorder %s255, %s258
      %p264 = scmp.eq.s32.totalorder %s35, 0
      %p265 = por %p263, %p264
      %p266 = scmp.ne.s32.totalorder %s255, %s258
      %p267 = scmp.eq.s32.totalorder %s40, 5
      %p268 = por %p266, %p267
      %p269 = scmp.ne.s32.totalorder %s258, %s259
      %p270 = scmp.eq.s32.totalorder %s40, 0
      %p271 = por %p269, %p270
      %p272 = scmp.ne.s32.totalorder %s258, %s259
      %p273 = scmp.eq.s32.totalorder %s41, 5
      %p274 = por %p272, %p273
      %p276 = scmp.ne.s32.totalorder %s259, %s275
      %p277 = scmp.eq.s32.totalorder %s41, 0
      %p278 = por %p276, %p277
      %s279 = ssub.s32 %s42, %s54
      %p280 = scmp.eq.s32.totalorder %s279, 0
      %s282 = sadd.s32 %s281, 1
      %s283 = scalar_select %p280, %s281, %s282
      %p286 = pneg %p280
      %p287 = scmp.eq.s32.totalorder %s35, 5
      %p288 = por %p286, %p287
      %p289 = scmp.ne.s32.totalorder %s281, %s284
      %p290 = scmp.eq.s32.totalorder %s35, 0
      %p291 = por %p289, %p290
      %p292 = scmp.ne.s32.totalorder %s281, %s284
      %p293 = scmp.eq.s32.totalorder %s40, 5
      %p294 = por %p292, %p293
      %p295 = scmp.ne.s32.totalorder %s284, %s285
      %p296 = scmp.eq.s32.totalorder %s40, 0
      %p297 = por %p295, %p296
      %p298 = scmp.ne.s32.totalorder %s284, %s285
      %p299 = scmp.eq.s32.totalorder %s41, 5
      %p300 = por %p298, %p299
      %p302 = scmp.ne.s32.totalorder %s285, %s301
      %p303 = scmp.eq.s32.totalorder %s41, 0
      %p304 = por %p302, %p303
      %p305 = scmp.le.s32.totalorder 1, %s35
      %p306 = scmp.lt.s32.totalorder %s35, 7
      %p307 = pnand %p305, %p306
      %p308 = pneg %p307
      // Predicated region
      $region9: #{weighted_layer_pooling.1} parent=5 // pred_check
        _
      $region10: #{weighted_layer_pooling.1} parent=5 // pred_check_branch
        %310 = sbr.rel (%p307) target = $region12
      $region11: #{weighted_layer_pooling.1} parent=5 // pred_region
        %s311 = ssub.s32 %s35, 1
      $region12: #{weighted_layer_pooling.1} parent=5 // pred_fallthru
        _
      %p312 = scmp.lt.s32.totalorder %s35, 6
      // Predicated region
      $region13: #{weighted_layer_pooling.1} parent=5 // pred_check
        %p313 = pneg %p312
      $region14: #{weighted_layer_pooling.1} parent=5 // pred_check_branch
        %315 = sbr.rel (%p313) target = $region16
      $region15: #{weighted_layer_pooling.1} parent=5 // pred_region
        // Predicated region
        $region17: #{weighted_layer_pooling.1} parent=15 // pred_check
          %p316 = pneg %p73
        $region18: #{weighted_layer_pooling.1} parent=15 // pred_check_branch
          %318 = sbr.rel (%p316) target = $region20
        $region19: #{weighted_layer_pooling.1} parent=15 // pred_region
          %s319 = sand.u32 %s63, 1
          %s320 = scalar_lea.sflag [#allocation5], %s319
          %s321 = sand.u32 %s63, 1
          %s322 = smul.addr %s321, 8
          %s323 = scalar_lea.vmem [#allocation4], %s322
          %s324 = smul.u32 %s43, 7
          %s325 = sadd.s32 %s324, 4
          %s327 = ssub.s32 128, 128
          %328 = vsyncadd %s320, %s327
          %s329 = smul.addr %s325, 2
          %s330 = sadd.s32 %s42, %s329
          %s331 = smul.addr %s330, 128
          %s332 = scalar_lea.hbm %s1, %s331
          %s334 = sshll.u32 %s323, 4
          %s335 = int_to_ptr.vmem [resolvable:$true] %s334
          %337 = dma.hbm_to_vmem [thread:$0]  %s332, 128, %s335, %s320
        $region20: #{weighted_layer_pooling.1} parent=15 // pred_fallthru
          _
        // Predicated region
        $region21: #{weighted_layer_pooling.1} parent=15 // pred_check
          %p338 = pneg %p105
        $region22: #{weighted_layer_pooling.1} parent=15 // pred_check_branch
          %340 = sbr.rel (%p338) target = $region24
        $region23: #{weighted_layer_pooling.1} parent=15 // pred_region
          %s341 = sand.u32 %s35, 1
          %s342 = scalar_lea.sflag [#allocation8], %s341
          %s343 = sand.u32 %s95, 1
          %s344 = smul.addr %s343, 8
          %s345 = scalar_lea.vmem [#allocation7], %s344
          %s346 = smul.u32 %s43, 7
          %s347 = sadd.s32 %s346, 5
          %s349 = ssub.s32 128, 128
          %350 = vsyncadd %s342, %s349
          %s351 = smul.addr %s347, 2
          %s352 = sadd.s32 %s42, %s351
          %s353 = smul.addr %s352, 128
          %s354 = scalar_lea.hbm %s2, %s353
          %s356 = sshll.u32 %s345, 4
          %s357 = int_to_ptr.vmem [resolvable:$true] %s356
          %359 = dma.hbm_to_vmem [thread:$0]  %s354, 128, %s357, %s342
        $region24: #{weighted_layer_pooling.1} parent=15 // pred_fallthru
          _
        // Predicated region
        $region25: #{weighted_layer_pooling.1} parent=15 // pred_check
          %p360 = pneg %p137
        $region26: #{weighted_layer_pooling.1} parent=15 // pred_check_branch
          %362 = sbr.rel (%p360) target = $region28
        $region27: #{weighted_layer_pooling.1} parent=15 // pred_region
          %s363 = sand.u32 %s35, 1
          %s364 = scalar_lea.sflag [#allocation8], %s363
          %s365 = sand.u32 %s127, 1
          %s366 = smul.addr %s365, 8
          %s367 = scalar_lea.vmem [#allocation9], %s366
          %s368 = smul.u32 %s43, 7
          %s369 = sadd.s32 %s368, 6
          %s371 = ssub.s32 128, 128
          %372 = vsyncadd %s364, %s371
          %s373 = smul.addr %s369, 2
          %s374 = sadd.s32 %s42, %s373
          %s375 = smul.addr %s374, 128
          %s376 = scalar_lea.hbm %s3, %s375
          %s378 = sshll.u32 %s367, 4
          %s379 = int_to_ptr.vmem [resolvable:$true] %s378
          %381 = dma.hbm_to_vmem [thread:$0]  %s376, 128, %s379, %s364
        $region28: #{weighted_layer_pooling.1} parent=15 // pred_fallthru
          _
        // Predicated region
        $region29: #{weighted_layer_pooling.1} parent=15 // pred_check
          %p382 = pneg %p169
        $region30: #{weighted_layer_pooling.1} parent=15 // pred_check_branch
          %384 = sbr.rel (%p382) target = $region32
        $region31: #{weighted_layer_pooling.1} parent=15 // pred_region
          %s385 = sand.u32 %s35, 1
          %s386 = scalar_lea.sflag [#allocation11], %s385
          %s387 = sand.u32 %s159, 1
          %s388 = smul.addr %s387, 8
          %s389 = scalar_lea.vmem [#allocation10], %s388
          %s390 = smul.u32 %s43, 7
          %s391 = sadd.s32 %s390, 7
          %s393 = ssub.s32 128, 128
          %394 = vsyncadd %s386, %s393
          %s395 = smul.addr %s391, 2
          %s396 = sadd.s32 %s42, %s395
          %s397 = smul.addr %s396, 128
          %s398 = scalar_lea.hbm %s4, %s397
          %s400 = sshll.u32 %s389, 4
          %s401 = int_to_ptr.vmem [resolvable:$true] %s400
          %403 = dma.hbm_to_vmem [thread:$0]  %s398, 128, %s401, %s386
        $region32: #{weighted_layer_pooling.1} parent=15 // pred_fallthru
          _
        // Predicated region
        $region33: #{weighted_layer_pooling.1} parent=15 // pred_check
          %p404 = pneg %p201
        $region34: #{weighted_layer_pooling.1} parent=15 // pred_check_branch
          %406 = sbr.rel (%p404) target = $region36
        $region35: #{weighted_layer_pooling.1} parent=15 // pred_region
          %s407 = sand.u32 %s35, 1
          %s408 = scalar_lea.sflag [#allocation11], %s407
          %s409 = sand.u32 %s191, 1
          %s410 = smul.addr %s409, 8
          %s411 = scalar_lea.vmem [#allocation12], %s410
          %s412 = smul.u32 %s43, 7
          %s413 = sadd.s32 %s412, 8
          %s415 = ssub.s32 128, 128
          %416 = vsyncadd %s408, %s415
          %s417 = smul.addr %s413, 2
          %s418 = sadd.s32 %s42, %s417
          %s419 = smul.addr %s418, 128
          %s420 = scalar_lea.hbm %s5, %s419
          %s422 = sshll.u32 %s411, 4
          %s423 = int_to_ptr.vmem [resolvable:$true] %s422
          %425 = dma.hbm_to_vmem [thread:$0]  %s420, 128, %s423, %s408
        $region36: #{weighted_layer_pooling.1} parent=15 // pred_fallthru
          _
        // Predicated region
        $region37: #{weighted_layer_pooling.1} parent=15 // pred_check
          %p426 = pneg %p233
        $region38: #{weighted_layer_pooling.1} parent=15 // pred_check_branch
          %428 = sbr.rel (%p426) target = $region40
        $region39: #{weighted_layer_pooling.1} parent=15 // pred_region
          %s429 = sand.u32 %s35, 1
          %s430 = scalar_lea.sflag [#allocation14], %s429
          %s431 = sand.u32 %s223, 1
          %s432 = smul.addr %s431, 8
          %s433 = scalar_lea.vmem [#allocation13], %s432
          %s434 = smul.u32 %s43, 7
          %s435 = sadd.s32 %s434, 9
          %s437 = ssub.s32 128, 128
          %438 = vsyncadd %s430, %s437
          %s439 = smul.addr %s435, 2
          %s440 = sadd.s32 %s42, %s439
          %s441 = smul.addr %s440, 128
          %s442 = scalar_lea.hbm %s6, %s441
          %s444 = sshll.u32 %s433, 4
          %s445 = int_to_ptr.vmem [resolvable:$true] %s444
          %447 = dma.hbm_to_vmem [thread:$0]  %s442, 128, %s445, %s430
        $region40: #{weighted_layer_pooling.1} parent=15 // pred_fallthru
          _
        // Predicated region
        $region41: #{weighted_layer_pooling.1} parent=15 // pred_check
          %p448 = pneg %p265
        $region42: #{weighted_layer_pooling.1} parent=15 // pred_check_branch
          %450 = sbr.rel (%p448) target = $region44
        $region43: #{weighted_layer_pooling.1} parent=15 // pred_region
          %s451 = sand.u32 %s35, 1
          %s452 = scalar_lea.sflag [#allocation14], %s451
          %s453 = sand.u32 %s255, 1
          %s454 = smul.addr %s453, 8
          %s455 = scalar_lea.vmem [#allocation15], %s454
          %s456 = smul.u32 %s43, 7
          %s457 = sadd.s32 %s456, 10
          %s459 = ssub.s32 128, 128
          %460 = vsyncadd %s452, %s459
          %s461 = smul.addr %s457, 2
          %s462 = sadd.s32 %s42, %s461
          %s463 = smul.addr %s462, 128
          %s464 = scalar_lea.hbm %s7, %s463
          %s466 = sshll.u32 %s455, 4
          %s467 = int_to_ptr.vmem [resolvable:$true] %s466
          %469 = dma.hbm_to_vmem [thread:$0]  %s464, 128, %s467, %s452
        $region44: #{weighted_layer_pooling.1} parent=15 // pred_fallthru
          _
      $region16: #{weighted_layer_pooling.1} parent=5 // pred_fallthru
        _
      %p470 = scmp.le.s32.totalorder 1, %s35
      %p471 = scmp.lt.s32.totalorder %s35, 7
      %p472 = pnand %p470, %p471
      %p473 = pneg %p472
      // Predicated region
      $region45: #{weighted_layer_pooling.1} parent=5 // pred_check
        _
      $region46: #{weighted_layer_pooling.1} parent=5 // pred_check_branch
        %475 = sbr.rel (%p472) target = $region48
      $region47: #{weighted_layer_pooling.1} parent=5 // pred_region
        %s476 = ssub.s32 %s35, 1
        %s477 = sand.u32 %s66, 1
        %s478 = scalar_lea.sflag [#allocation5], %s477
        %s479 = sand.u32 %s66, 1
        %s480 = smul.addr %s479, 8
        %s481 = scalar_lea.vmem [#allocation4], %s480
        // Predicated region
        $region49: #{weighted_layer_pooling.1} parent=47 // pred_check
          %p482 = pneg %p79
        $region50: #{weighted_layer_pooling.1} parent=47 // pred_check_branch
          %484 = sbr.rel (%p482) target = $region52
        $region51: #{weighted_layer_pooling.1} parent=47 // pred_region
          %485 = dma.done %s478, 128
        $region52: #{weighted_layer_pooling.1} parent=47 // pred_fallthru
          _
        %s486 = sand.u32 %s40, 1
        %s487 = scalar_lea.sflag [#allocation8], %s486
        %s488 = sand.u32 %s98, 1
        %s489 = smul.addr %s488, 8
        %s490 = scalar_lea.vmem [#allocation7], %s489
        // Predicated region
        $region53: #{weighted_layer_pooling.1} parent=47 // pred_check
          %p491 = pneg %p111
        $region54: #{weighted_layer_pooling.1} parent=47 // pred_check_branch
          %493 = sbr.rel (%p491) target = $region56
        $region55: #{weighted_layer_pooling.1} parent=47 // pred_region
          %494 = dma.done %s487, 128
        $region56: #{weighted_layer_pooling.1} parent=47 // pred_fallthru
          _
        %s495 = sand.u32 %s40, 1
        %s496 = scalar_lea.sflag [#allocation8], %s495
        %s497 = sand.u32 %s130, 1
        %s498 = smul.addr %s497, 8
        %s499 = scalar_lea.vmem [#allocation9], %s498
        // Predicated region
        $region57: #{weighted_layer_pooling.1} parent=47 // pred_check
          %p500 = pneg %p143
        $region58: #{weighted_layer_pooling.1} parent=47 // pred_check_branch
          %502 = sbr.rel (%p500) target = $region60
        $region59: #{weighted_layer_pooling.1} parent=47 // pred_region
          %503 = dma.done %s496, 128
        $region60: #{weighted_layer_pooling.1} parent=47 // pred_fallthru
          _
        %s504 = sand.u32 %s40, 1
        %s505 = scalar_lea.sflag [#allocation11], %s504
        %s506 = sand.u32 %s162, 1
        %s507 = smul.addr %s506, 8
        %s508 = scalar_lea.vmem [#allocation10], %s507
        // Predicated region
        $region61: #{weighted_layer_pooling.1} parent=47 // pred_check
          %p509 = pneg %p175
        $region62: #{weighted_layer_pooling.1} parent=47 // pred_check_branch
          %511 = sbr.rel (%p509) target = $region64
        $region63: #{weighted_layer_pooling.1} parent=47 // pred_region
          %512 = dma.done %s505, 128
        $region64: #{weighted_layer_pooling.1} parent=47 // pred_fallthru
          _
        %s513 = sand.u32 %s40, 1
        %s514 = scalar_lea.sflag [#allocation11], %s513
        %s515 = sand.u32 %s194, 1
        %s516 = smul.addr %s515, 8
        %s517 = scalar_lea.vmem [#allocation12], %s516
        // Predicated region
        $region65: #{weighted_layer_pooling.1} parent=47 // pred_check
          %p518 = pneg %p207
        $region66: #{weighted_layer_pooling.1} parent=47 // pred_check_branch
          %520 = sbr.rel (%p518) target = $region68
        $region67: #{weighted_layer_pooling.1} parent=47 // pred_region
          %521 = dma.done %s514, 128
        $region68: #{weighted_layer_pooling.1} parent=47 // pred_fallthru
          _
        %s522 = sand.u32 %s40, 1
        %s523 = scalar_lea.sflag [#allocation14], %s522
        %s524 = sand.u32 %s226, 1
        %s525 = smul.addr %s524, 8
        %s526 = scalar_lea.vmem [#allocation13], %s525
        // Predicated region
        $region69: #{weighted_layer_pooling.1} parent=47 // pred_check
          %p527 = pneg %p239
        $region70: #{weighted_layer_pooling.1} parent=47 // pred_check_branch
          %529 = sbr.rel (%p527) target = $region72
        $region71: #{weighted_layer_pooling.1} parent=47 // pred_region
          %530 = dma.done %s523, 128
        $region72: #{weighted_layer_pooling.1} parent=47 // pred_fallthru
          _
        %s531 = sand.u32 %s40, 1
        %s532 = scalar_lea.sflag [#allocation14], %s531
        %s533 = sand.u32 %s258, 1
        %s534 = smul.addr %s533, 8
        %s535 = scalar_lea.vmem [#allocation15], %s534
        // Predicated region
        $region73: #{weighted_layer_pooling.1} parent=47 // pred_check
          %p536 = pneg %p271
        $region74: #{weighted_layer_pooling.1} parent=47 // pred_check_branch
          %538 = sbr.rel (%p536) target = $region76
        $region75: #{weighted_layer_pooling.1} parent=47 // pred_region
          %539 = dma.done %s532, 128
        $region76: #{weighted_layer_pooling.1} parent=47 // pred_fallthru
          _
        %s540 = sand.u32 %s66, 1
        %s541 = scalar_lea.sflag [#allocation5], %s540
        %s542 = sand.u32 %s66, 1
        %s543 = smul.addr %s542, 8
        %s544 = scalar_lea.vmem [#allocation4], %s543
        %p545 = pneg %p79
        %p546 = pneg %p76
        %s547 = sand.u32 %s40, 1
        %s548 = scalar_lea.sflag [#allocation8], %s547
        %s549 = sand.u32 %s98, 1
        %s550 = smul.addr %s549, 8
        %s551 = scalar_lea.vmem [#allocation7], %s550
        %p552 = pneg %p111
        %p553 = pneg %p108
        %s554 = sand.u32 %s40, 1
        %s555 = scalar_lea.sflag [#allocation8], %s554
        %s556 = sand.u32 %s130, 1
        %s557 = smul.addr %s556, 8
        %s558 = scalar_lea.vmem [#allocation9], %s557
        %p559 = pneg %p143
        %p560 = pneg %p140
        %s561 = sand.u32 %s40, 1
        %s562 = scalar_lea.sflag [#allocation11], %s561
        %s563 = sand.u32 %s162, 1
        %s564 = smul.addr %s563, 8
        %s565 = scalar_lea.vmem [#allocation10], %s564
        %p566 = pneg %p175
        %p567 = pneg %p172
        %s568 = sand.u32 %s40, 1
        %s569 = scalar_lea.sflag [#allocation11], %s568
        %s570 = sand.u32 %s194, 1
        %s571 = smul.addr %s570, 8
        %s572 = scalar_lea.vmem [#allocation12], %s571
        %p573 = pneg %p207
        %p574 = pneg %p204
        %s575 = sand.u32 %s40, 1
        %s576 = scalar_lea.sflag [#allocation14], %s575
        %s577 = sand.u32 %s226, 1
        %s578 = smul.addr %s577, 8
        %s579 = scalar_lea.vmem [#allocation13], %s578
        %p580 = pneg %p239
        %p581 = pneg %p236
        %s582 = sand.u32 %s40, 1
        %s583 = scalar_lea.sflag [#allocation14], %s582
        %s584 = sand.u32 %s258, 1
        %s585 = smul.addr %s584, 8
        %s586 = scalar_lea.vmem [#allocation15], %s585
        %p587 = pneg %p271
        %p588 = pneg %p268
        %p589 = pneg %p297
        %p590 = pneg %p294
        %s591 = sand.u32 %s284, 1
        %s592 = scalar_lea.sflag [#allocation6], %s591
        %s593 = sand.u32 %s284, 1
        %s594 = smul.addr %s593, 8
        %s595 = scalar_lea.vmem [#allocation16], %s594
        %s596 = smul.u32 %s45, 7
        %s597 = sadd.s32 %s596, 4
        %s598 = smul.u32 %s45, 7
        %s599 = sadd.s32 %s598, 5
        %s600 = smul.u32 %s45, 7
        %s601 = sadd.s32 %s600, 6
        %s602 = smul.u32 %s45, 7
        %s603 = sadd.s32 %s602, 7
        %s604 = smul.u32 %s45, 7
        %s605 = sadd.s32 %s604, 8
        %s606 = smul.u32 %s45, 7
        %s607 = sadd.s32 %s606, 9
        %s608 = smul.u32 %s45, 7
        %s609 = sadd.s32 %s608, 10
        %s610 = smul.u32 %s45, 7
        %s611 = sld [smem:[#allocation3 + %s610]]
        %v612 = vld [vmem:[%s481] sm:$0xff]
        %v613 = vstv %s611
        %v614 = vmul.f32 %v613, %v612
        %s615 = sadd.s32 %s610, 1
        %s616 = sld [smem:[#allocation3 + %s615]]
        %v617 = vld [vmem:[%s490] sm:$0xff]
        %v618 = vstv %s616
        %v619 = vmul.f32 %v618, %v617
        %v620 = vadd.f32 %v614, %v619
        %s621 = sadd.s32 %s610, 2
        %s622 = sld [smem:[#allocation3 + %s621]]
        %v623 = vld [vmem:[%s499] sm:$0xff]
        %v624 = vstv %s622
        %v625 = vmul.f32 %v624, %v623
        %v626 = vadd.f32 %v620, %v625
        %s627 = sadd.s32 %s610, 3
        %s628 = sld [smem:[#allocation3 + %s627]]
        %v629 = vld [vmem:[%s508] sm:$0xff]
        %v630 = vstv %s628
        %v631 = vmul.f32 %v630, %v629
        %v632 = vadd.f32 %v626, %v631
        %s633 = sadd.s32 %s610, 4
        %s634 = sld [smem:[#allocation3 + %s633]]
        %v635 = vld [vmem:[%s517] sm:$0xff]
        %v636 = vstv %s634
        %v637 = vmul.f32 %v636, %v635
        %v638 = vadd.f32 %v632, %v637
        %s639 = sadd.s32 %s610, 5
        %s640 = sld [smem:[#allocation3 + %s639]]
        %v641 = vld [vmem:[%s526] sm:$0xff]
        %v642 = vstv %s640
        %v643 = vmul.f32 %v642, %v641
        %v644 = vadd.f32 %v638, %v643
        %s645 = sadd.s32 %s610, 6
        %s646 = sld [smem:[#allocation3 + %s645]]
        %v647 = vld [vmem:[%s535] sm:$0xff]
        %v648 = vstv %s646
        %v649 = vmul.f32 %v648, %v647
        %v650 = vadd.f32 %v644, %v649
        %p651 = scmp.eq.s32.totalorder %s45, 0
        // Predicated region
        $region77: #{weighted_layer_pooling.1} parent=47 // pred_check
          %p652 = pneg %p651
        $region78: #{weighted_layer_pooling.1} parent=47 // pred_check_branch
          %654 = sbr.rel (%p652) target = $region80
        $region79: #{weighted_layer_pooling.1} parent=47 // pred_region
          %vm655 = vcmask 261120
          %656 = vst.msk [vmem:[%s595] sm:$0xff] %vm655, %v650
        $region80: #{weighted_layer_pooling.1} parent=47 // pred_fallthru
          _
        %p657 = scmp.gt.s32.totalorder %s45, 0
        %p658 = scmp.lt.s32.totalorder %s45, 2
        %p659 = pnand %p657, %p658
        %p660 = pneg %p659
        // Predicated region
        $region81: #{weighted_layer_pooling.1} parent=47 // pred_check
          _
        $region82: #{weighted_layer_pooling.1} parent=47 // pred_check_branch
          %662 = sbr.rel (%p659) target = $region84
        $region83: #{weighted_layer_pooling.1} parent=47 // pred_region
          %v663 = vld [vmem:[%s595] sm:$0xff]
          %v664 = vadd.f32 %v663, %v650
          %vm665 = vcmask 261120
          %666 = vst.msk [vmem:[%s595] sm:$0xff] %vm665, %v664
        $region84: #{weighted_layer_pooling.1} parent=47 // pred_fallthru
          _
        %p667 = scmp.eq.s32.totalorder %s45, 2
        // Predicated region
        $region85: #{weighted_layer_pooling.1} parent=47 // pred_check
          %p668 = pneg %p667
        $region86: #{weighted_layer_pooling.1} parent=47 // pred_check_branch
          %670 = sbr.rel (%p668) target = $region88
        $region87: #{weighted_layer_pooling.1} parent=47 // pred_region
          %v671 = vld [vmem:[%s595] sm:$0xff]
          %v672 = vadd.f32 %v671, %v650
          %vm673 = vcmask 261120
          %674 = vst.msk [vmem:[%s595] sm:$0xff] %vm673, %v672
        $region88: #{weighted_layer_pooling.1} parent=47 // pred_fallthru
          _
        %s675 = sand.u32 %s284, 1
        %s676 = scalar_lea.sflag [#allocation6], %s675
        %s677 = sand.u32 %s284, 1
        %s678 = smul.addr %s677, 8
        %s679 = scalar_lea.vmem [#allocation16], %s678
        // Predicated region
        $region89: #{weighted_layer_pooling.1} parent=47 // pred_check
          %p680 = pneg %p294
        $region90: #{weighted_layer_pooling.1} parent=47 // pred_check_branch
          %682 = sbr.rel (%p680) target = $region92
        $region91: #{weighted_layer_pooling.1} parent=47 // pred_region
          %s684 = ssub.s32 128, 128
          %685 = vsyncadd %s676, %s684
          %s686 = smul.addr %s44, 128
          %s687 = scalar_lea.hbm %s8, %s686
          %s689 = sshll.u32 %s679, 4
          %s690 = int_to_ptr.vmem [resolvable:$true] %s689
          %692 = dma.vmem_to_hbm [thread:$0]  %s690, 128, %s687, %s676
        $region92: #{weighted_layer_pooling.1} parent=47 // pred_fallthru
          _
      $region48: #{weighted_layer_pooling.1} parent=5 // pred_fallthru
        _
      %p693 = scmp.le.s32.totalorder 2, %s35
      // Predicated region
      $region93: #{weighted_layer_pooling.1} parent=5 // pred_check
        %p694 = pneg %p693
      $region94: #{weighted_layer_pooling.1} parent=5 // pred_check_branch
        %696 = sbr.rel (%p694) target = $region96
      $region95: #{weighted_layer_pooling.1} parent=5 // pred_region
        %s697 = ssub.s32 %s35, 2
        // Predicated region
        $region97: #{weighted_layer_pooling.1} parent=95 // pred_check
          %p698 = pneg %p300
        $region98: #{weighted_layer_pooling.1} parent=95 // pred_check_branch
          %700 = sbr.rel (%p698) target = $region100
        $region99: #{weighted_layer_pooling.1} parent=95 // pred_region
          %s701 = sand.u32 %s285, 1
          %s702 = scalar_lea.sflag [#allocation6], %s701
          %s703 = sand.u32 %s285, 1
          %s704 = smul.addr %s703, 8
          %s705 = scalar_lea.vmem [#allocation16], %s704
          %706 = dma.done %s702, 128
        $region100: #{weighted_layer_pooling.1} parent=95 // pred_fallthru
          _
      $region96: #{weighted_layer_pooling.1} parent=5 // pred_fallthru
        _
    $region6: #{weighted_layer_pooling.1} parent=1 // loop_footer
      %s39 = sadd.s32 1, %s35
    $region7: #{weighted_layer_pooling.1} parent=1 // loop_footer_branch
      %34 = sbr.rel target = $region3
    $region8: #{weighted_layer_pooling.1} parent=1 // loop_exit
      _
    %707 = vsyncpa [#allocation5], 1
    %s708 = scalar_lea.sflag [#allocation5], 1
    %709 = vsyncpa %s708, 1
    %710 = vsyncpa [#allocation8], 1
    %s711 = scalar_lea.sflag [#allocation8], 1
    %712 = vsyncpa %s711, 1
    %713 = vsyncpa [#allocation11], 1
    %s714 = scalar_lea.sflag [#allocation11], 1
    %715 = vsyncpa %s714, 1
    %716 = vsyncpa [#allocation14], 1
    %s717 = scalar_lea.sflag [#allocation14], 1
    %718 = vsyncpa %s717, 1
    %719 = vsyncpa [#allocation6], 1
    %s720 = scalar_lea.sflag [#allocation6], 1
    %721 = vsyncpa %s720, 1

</llo_original>
